<compile_context>
chip_gen: v7x
topology: tpu7x:2x2x1
jax: 0.10.0
libtpu: 0.0.40
codegen_flags: <defaults>
</compile_context>

<pallas_src>
import functools

import jax
import jax.numpy as jnp
from jax.experimental import pallas as pl
from jax.experimental.pallas import tpu as pltpu

LANE = 128  # TPU lane width; final logits are padded to this many columns


def _round_up(n, m):
    return ((n + m - 1) // m) * m


# ----------------------------- kernel ---------------------------------------

def _highway_fused_kernel(x_ref, w_ref, b_ref, wc_ref, bc_ref, o_ref,
                          *, num_layers, size, out_dim):
    x = x_ref[...]                                         # (BT, S) f32

    # Statically unrolled layer loop; weights live in VMEM for the whole call.
    for layer in range(num_layers):
        # One fused MXU push per layer: [BT, S] @ [S, 3S] -> [BT, 3S] (f32 acc)
        # fused RHS column order: [gate | nonlinear | linear].
        z = jnp.dot(x.astype(jnp.bfloat16), w_ref[layer],
                    preferred_element_type=jnp.float32) + b_ref[layer]
        zg = z[:, :size]
        zn = z[:, size:2 * size]
        zl = z[:, 2 * size:]

        # sigmoid via EUP exp + EUP approx reciprocal (keeps divide off VALU).
        gate = pl.reciprocal(1.0 + jnp.exp(-zg), approx=True)
        nonlinear = jnp.maximum(zn, 0.0)                   # f = ReLU
        x = zl + gate * (nonlinear - zl)                   # gate*nl + (1-g)*lin

    # Connect (S -> out_dim, lane-padded to 128) + masked log_softmax.
    logits = (jnp.dot(x.astype(jnp.bfloat16), wc_ref[...],
                      preferred_element_type=jnp.float32) + bc_ref[...])
    col = jax.lax.broadcasted_iota(jnp.int32, logits.shape, 1)
    valid = col < out_dim
    masked = jnp.where(valid, logits, -jnp.inf)
    m = jnp.max(masked, axis=1, keepdims=True)
    shifted = masked - m
    lse = jnp.log(jnp.sum(jnp.exp(shifted), axis=1, keepdims=True))
    # Zero the padded lanes; caller slices [:, :out_dim] anyway.
    o_ref[...] = jnp.where(valid, shifted - lse, 0.0)


# ----------------------------- wrapper --------------------------------------

@functools.partial(jax.jit, static_argnames=("num_layers", "size", "out_dim"))
def highway_forward(x, w_stack, b_stack, wc_pad, bc_pad,
                    num_layers, size, out_dim):
    assert num_layers >= 1
    B = x.shape[0]
    L = num_layers

    # Batch tiling: one "parallel" grid axis (v7x can shard tiles across its
    # two TensorCores). Single tile at small B; 256-row tiles for large B so
    # the MXU rows fill up.
    bt = 256 if B >= 256 else _round_up(B, 8)
    B_pad = _round_up(B, bt)
    if B_pad != B:
        x = jnp.pad(x, ((0, B_pad - B), (0, 0)))

    flops = 2 * L * B_pad * size * (3 * size) + 2 * B_pad * size * LANE
    transcendentals = 2 * L * B_pad * size + B_pad * (LANE + 1)
    bytes_accessed = (B_pad * size * 4 + w_stack.size * 2 + b_stack.size * 4
                      + wc_pad.size * 2 + bc_pad.size * 4 + B_pad * LANE * 4)

    kernel = functools.partial(_highway_fused_kernel, num_layers=num_layers,
                               size=size, out_dim=out_dim)
    padded = pl.pallas_call(
        kernel,
        out_shape=jax.ShapeDtypeStruct((B_pad, LANE), jnp.float32),
        grid_spec=pltpu.PrefetchScalarGridSpec(
            num_scalar_prefetch=0,
            grid=(B_pad // bt,),
            in_specs=[
                pl.BlockSpec((bt, size), lambda i: (i, 0)),              # x tile
                pl.BlockSpec((L, size, 3 * size), lambda i: (0, 0, 0)),  # all W slabs
                pl.BlockSpec((L, 1, 3 * size), lambda i: (0, 0, 0)),     # all biases
                pl.BlockSpec((size, LANE), lambda i: (0, 0)),            # wc (padded)
                pl.BlockSpec((1, LANE), lambda i: (0, 0)),               # bc (padded)
            ],
            out_specs=pl.BlockSpec((bt, LANE), lambda i: (i, 0)),
        ),
        compiler_params=pltpu.CompilerParams(
            dimension_semantics=("parallel",)),
        cost_estimate=pl.CostEstimate(flops=flops,
                                      transcendentals=transcendentals,
                                      bytes_accessed=bytes_accessed),
    )(x, w_stack, b_stack, wc_pad, bc_pad)
    return padded[:B, :out_dim]


# ----------------------------- param init -----------------------------------

def init_params(key, size, num_layers, connect_in=128, connect_out=41):
    """Deterministic init mimicking nn.Linear default (uniform +-1/sqrt(fan_in)).

    Weights are stored pre-transposed to [in, out]. Per-layer gate/nonlinear/
    linear weights are concatenated along the output axis into a single
    [size, 3*size] slab; all layers are stacked into [L, size, 3*size] and cast
    to bf16 (MXU operands). Biases stay f32. The connect weight/bias are
    zero-padded to LANE output columns.
    """
    bound = 1.0 / jnp.sqrt(jnp.float32(size))
    w_layers, b_layers = [], []
    for _ in range(num_layers):
        keys = jax.random.split(key, 7)
        key = keys[0]
        wg = jax.random.uniform(keys[1], (size, size), jnp.float32, -bound, bound)
        bg = jax.random.uniform(keys[2], (1, size), jnp.float32, -bound, bound)
        wn = jax.random.uniform(keys[3], (size, size), jnp.float32, -bound, bound)
        bn = jax.random.uniform(keys[4], (1, size), jnp.float32, -bound, bound)
        wl = jax.random.uniform(keys[5], (size, size), jnp.float32, -bound, bound)
        bl = jax.random.uniform(keys[6], (1, size), jnp.float32, -bound, bound)
        w_layers.append(jnp.concatenate([wg, wn, wl], axis=1))   # [S, 3S]
        b_layers.append(jnp.concatenate([bg, bn, bl], axis=1))   # [1, 3S]
    w_stack = jnp.stack(w_layers, axis=0).astype(jnp.bfloat16)   # [L, S, 3S] bf16
    b_stack = jnp.stack(b_layers, axis=0)                        # [L, 1, 3S] f32

    kc1, kc2 = jax.random.split(key)
    cbound = 1.0 / jnp.sqrt(jnp.float32(connect_in))
    wc = jax.random.uniform(kc1, (connect_in, connect_out), jnp.float32,
                            -cbound, cbound)
    bc = jax.random.uniform(kc2, (1, connect_out), jnp.float32, -cbound, cbound)
    wc_pad = (jnp.zeros((connect_in, LANE), jnp.float32)
              .at[:, :connect_out].set(wc).astype(jnp.bfloat16))
    bc_pad = jnp.zeros((1, LANE), jnp.float32).at[:, :connect_out].set(bc)
    return w_stack, b_stack, wc_pad, bc_pad


# ----------------------------- reference ------------------------------------

def highway_forward_ref(x, w_stack, b_stack, wc_pad, bc_pad,
                        num_layers, size, out_dim):
    # Pure-JAX reference with identical bf16 MXU-operand casting (f32 accum,
    # f32 elementwise), exact sigmoid.
    for layer in range(num_layers):
        w = w_stack[layer]                      # bf16 [S, 3S]
        b = b_stack[layer]                      # f32  [1, 3S]
        z = jnp.dot(x.astype(jnp.bfloat16), w,
                    preferred_element_type=jnp.float32) + b
        zg, zn, zl = z[:, :size], z[:, size:2 * size], z[:, 2 * size:]
        gate = jax.nn.sigmoid(zg)
        x = zl + gate * (jax.nn.relu(zn) - zl)
    logits = (jnp.dot(x.astype(jnp.bfloat16), wc_pad[:, :out_dim],
                      preferred_element_type=jnp.float32)
              + bc_pad[:, :out_dim])
    return jax.nn.log_softmax(logits, axis=1)


# ----------------------------- main -----------------------------------------

if __name__ == "__main__":
    # size must be 128 so the module's hard-coded connect Linear(128, 41) is
    # consistent with the highway feature size.
    batch, size, num_layers, out_dim = 8, 128, 2, 41

    key = jax.random.PRNGKey(0)
    kx, kp = jax.random.split(key)
    x = jax.random.normal(kx, (batch, size), jnp.float32)
    w_stack, b_stack, wc_pad, bc_pad = init_params(kp, size, num_layers,
                                                   connect_in=size,
                                                   connect_out=out_dim)

    out = highway_forward(x, w_stack, b_stack, wc_pad, bc_pad,
                          num_layers, size, out_dim)
    out = jax.block_until_ready(out)

    ref = highway_forward_ref(x, w_stack, b_stack, wc_pad, bc_pad,
                              num_layers, size, out_dim)
    assert out.shape == (batch, out_dim), out.shape
    # bf16 MXU operands + approx EUP reciprocal in the gate -> tolerance ~1e-2.
    assert jnp.allclose(out, ref, atol=1e-2, rtol=1e-2), "mismatch vs reference"

    print("KERNEL_OK")
</pallas_src>

<mosaic_0001>
module attributes {stable_mosaic.version = 11 : i64} {
  func.func @_highway_fused_kernel(%arg0: i32, %arg1: memref<8x128xf32, #tpu.memory_space<vmem>>, %arg2: memref<2x128x384xbf16, #tpu.memory_space<vmem>>, %arg3: memref<2x1x384xf32, #tpu.memory_space<vmem>>, %arg4: memref<128x128xbf16, #tpu.memory_space<vmem>>, %arg5: memref<1x128xf32, #tpu.memory_space<vmem>>, %arg6: memref<8x128xf32, #tpu.memory_space<vmem>>) attributes {dimension_semantics = [#tpu.dimension_semantics<parallel>], iteration_bounds = array<i64: 1>, scalar_prefetch = 0 : i64, scratch_operands = 0 : i64, tpu.core_type = #tpu.core_type<tc>, window_params = [{transform_indices = @transform_0, window_bounds = array<i64: 8, 128>}, {pipeline_mode = #tpu.pipeline_mode<synchronous>, transform_indices = @transform_1, window_bounds = array<i64: 2, 128, 384>}, {pipeline_mode = #tpu.pipeline_mode<synchronous>, transform_indices = @transform_2, window_bounds = array<i64: 2, 1, 384>}, {pipeline_mode = #tpu.pipeline_mode<synchronous>, transform_indices = @transform_3, window_bounds = array<i64: 128, 128>}, {pipeline_mode = #tpu.pipeline_mode<synchronous>, transform_indices = @transform_4, window_bounds = array<i64: 1, 128>}, {transform_indices = @transform_5, window_bounds = array<i64: 8, 128>}]} {
    %c0 = arith.constant 0 : index
    %c0_0 = arith.constant 0 : index
    %0 = vector.load %arg1[%c0, %c0_0] : memref<8x128xf32, #tpu.memory_space<vmem>>, vector<8x128xf32>
    %1 = arith.truncf %0 : vector<8x128xf32> to vector<8x128xbf16>
    %c0_1 = arith.constant 0 : index
    %c0_2 = arith.constant 0 : index
    %c0_3 = arith.constant 0 : index
    %2 = vector.load %arg2[%c0_1, %c0_2, %c0_3] : memref<2x128x384xbf16, #tpu.memory_space<vmem>>, vector<1x128x384xbf16>
    %3 = vector.shape_cast %2 : vector<1x128x384xbf16> to vector<128x384xbf16>
    %cst = arith.constant dense<0.000000e+00> : vector<8x384xf32>
    %4 = tpu.matmul %1, %3, %cst {dimension_numbers = #tpu.dot_dimension_numbers<[1], [0], [0], [1], [0, 0, 1, 1], [], []>} : vector<8x128xbf16>, vector<128x384xbf16>, vector<8x384xf32> -> vector<8x384xf32>
    %c0_4 = arith.constant 0 : index
    %c0_5 = arith.constant 0 : index
    %c0_6 = arith.constant 0 : index
    %5 = vector.load %arg3[%c0_4, %c0_5, %c0_6] : memref<2x1x384xf32, #tpu.memory_space<vmem>>, vector<1x1x384xf32>
    %6 = vector.shape_cast %5 : vector<1x1x384xf32> to vector<1x384xf32>
    %7 = vector.broadcast %6 : vector<1x384xf32> to vector<8x384xf32>
    %8 = arith.addf %4, %7 : vector<8x384xf32>
    %9 = vector.extract_strided_slice %8 {offsets = [0, 0], sizes = [8, 128], strides = [1, 1]} : vector<8x384xf32> to vector<8x128xf32>
    %10 = vector.extract_strided_slice %8 {offsets = [0, 128], sizes = [8, 128], strides = [1, 1]} : vector<8x384xf32> to vector<8x128xf32>
    %11 = vector.extract_strided_slice %8 {offsets = [0, 256], sizes = [8, 128], strides = [1, 1]} : vector<8x384xf32> to vector<8x128xf32>
    %cst_7 = arith.constant 0.000000e+00 : f32
    %12 = vector.broadcast %cst_7 : f32 to vector<8x128xf32>
    %13 = arith.subf %12, %9 : vector<8x128xf32>
    %14 = math.exp %13 : vector<8x128xf32>
    %cst_8 = arith.constant 1.000000e+00 : f32
    %15 = vector.broadcast %cst_8 : f32 to vector<8x128xf32>
    %16 = arith.addf %15, %14 : vector<8x128xf32>
    %17 = tpu.reciprocal %16 {approx = true} : vector<8x128xf32> -> vector<8x128xf32>
    %cst_9 = arith.constant 0.000000e+00 : f32
    %18 = vector.broadcast %cst_9 : f32 to vector<8x128xf32>
    %19 = arith.maximumf %10, %18 : vector<8x128xf32>
    %20 = arith.subf %19, %11 : vector<8x128xf32>
    %21 = arith.mulf %17, %20 : vector<8x128xf32>
    %22 = arith.addf %11, %21 : vector<8x128xf32>
    %23 = arith.truncf %22 : vector<8x128xf32> to vector<8x128xbf16>
    %c1 = arith.constant 1 : index
    %c0_10 = arith.constant 0 : index
    %c0_11 = arith.constant 0 : index
    %24 = vector.load %arg2[%c1, %c0_10, %c0_11] : memref<2x128x384xbf16, #tpu.memory_space<vmem>>, vector<1x128x384xbf16>
    %25 = vector.shape_cast %24 : vector<1x128x384xbf16> to vector<128x384xbf16>
    %cst_12 = arith.constant dense<0.000000e+00> : vector<8x384xf32>
    %26 = tpu.matmul %23, %25, %cst_12 {dimension_numbers = #tpu.dot_dimension_numbers<[1], [0], [0], [1], [0, 0, 1, 1], [], []>} : vector<8x128xbf16>, vector<128x384xbf16>, vector<8x384xf32> -> vector<8x384xf32>
    %c1_13 = arith.constant 1 : index
    %c0_14 = arith.constant 0 : index
    %c0_15 = arith.constant 0 : index
    %27 = vector.load %arg3[%c1_13, %c0_14, %c0_15] : memref<2x1x384xf32, #tpu.memory_space<vmem>>, vector<1x1x384xf32>
    %28 = vector.shape_cast %27 : vector<1x1x384xf32> to vector<1x384xf32>
    %29 = vector.broadcast %28 : vector<1x384xf32> to vector<8x384xf32>
    %30 = arith.addf %26, %29 : vector<8x384xf32>
    %31 = vector.extract_strided_slice %30 {offsets = [0, 0], sizes = [8, 128], strides = [1, 1]} : vector<8x384xf32> to vector<8x128xf32>
    %32 = vector.extract_strided_slice %30 {offsets = [0, 128], sizes = [8, 128], strides = [1, 1]} : vector<8x384xf32> to vector<8x128xf32>
    %33 = vector.extract_strided_slice %30 {offsets = [0, 256], sizes = [8, 128], strides = [1, 1]} : vector<8x384xf32> to vector<8x128xf32>
    %cst_16 = arith.constant 0.000000e+00 : f32
    %34 = vector.broadcast %cst_16 : f32 to vector<8x128xf32>
    %35 = arith.subf %34, %31 : vector<8x128xf32>
    %36 = math.exp %35 : vector<8x128xf32>
    %cst_17 = arith.constant 1.000000e+00 : f32
    %37 = vector.broadcast %cst_17 : f32 to vector<8x128xf32>
    %38 = arith.addf %37, %36 : vector<8x128xf32>
    %39 = tpu.reciprocal %38 {approx = true} : vector<8x128xf32> -> vector<8x128xf32>
    %cst_18 = arith.constant 0.000000e+00 : f32
    %40 = vector.broadcast %cst_18 : f32 to vector<8x128xf32>
    %41 = arith.maximumf %32, %40 : vector<8x128xf32>
    %42 = arith.subf %41, %33 : vector<8x128xf32>
    %43 = arith.mulf %39, %42 : vector<8x128xf32>
    %44 = arith.addf %33, %43 : vector<8x128xf32>
    %45 = arith.truncf %44 : vector<8x128xf32> to vector<8x128xbf16>
    %c0_19 = arith.constant 0 : index
    %c0_20 = arith.constant 0 : index
    %46 = vector.load %arg4[%c0_19, %c0_20] : memref<128x128xbf16, #tpu.memory_space<vmem>>, vector<128x128xbf16>
    %cst_21 = arith.constant dense<0.000000e+00> : vector<8x128xf32>
    %47 = tpu.matmul %45, %46, %cst_21 {dimension_numbers = #tpu.dot_dimension_numbers<[1], [0], [0], [1], [0, 0, 1, 1], [], []>} : vector<8x128xbf16>, vector<128x128xbf16>, vector<8x128xf32> -> vector<8x128xf32>
    %c0_22 = arith.constant 0 : index
    %c0_23 = arith.constant 0 : index
    %48 = vector.load %arg5[%c0_22, %c0_23] : memref<1x128xf32, #tpu.memory_space<vmem>>, vector<1x128xf32>
    %49 = vector.broadcast %48 : vector<1x128xf32> to vector<8x128xf32>
    %50 = arith.addf %47, %49 : vector<8x128xf32>
    %51 = tpu.iota {dimensions = array<i32: 1>} : vector<8x128xi32>
    %c41_i32 = arith.constant 41 : i32
    %52 = vector.broadcast %c41_i32 : i32 to vector<8x128xi32>
    %53 = arith.cmpi slt, %51, %52 : vector<8x128xi32>
    %cst_24 = arith.constant 0xFF800000 : f32
    %54 = vector.broadcast %cst_24 : f32 to vector<8x128xf32>
    %55 = arith.select %53, %50, %54 : vector<8x128xi1>, vector<8x128xf32>
    %cst_25 = arith.constant dense<0xFF800000> : vector<8xf32>
    %56 = vector.multi_reduction <maximumf>, %55, %cst_25 [1] : vector<8x128xf32> to vector<8xf32>
    %57 = vector.shape_cast %56 : vector<8xf32> to vector<8x1xf32>
    %58 = vector.broadcast %57 : vector<8x1xf32> to vector<8x128xf32>
    %59 = arith.subf %55, %58 : vector<8x128xf32>
    %60 = math.exp %59 : vector<8x128xf32>
    %cst_26 = arith.constant dense<0.000000e+00> : vector<8xf32>
    %61 = vector.multi_reduction <add>, %60, %cst_26 [1] : vector<8x128xf32> to vector<8xf32>
    %62 = vector.shape_cast %61 : vector<8xf32> to vector<8x1xf32>
    %63 = math.log %62 : vector<8x1xf32>
    %64 = vector.broadcast %63 : vector<8x1xf32> to vector<8x128xf32>
    %65 = arith.subf %59, %64 : vector<8x128xf32>
    %cst_27 = arith.constant 0.000000e+00 : f32
    %66 = vector.broadcast %cst_27 : f32 to vector<8x128xf32>
    %67 = arith.select %53, %65, %66 : vector<8x128xi1>, vector<8x128xf32>
    %c0_28 = arith.constant 0 : index
    %c0_29 = arith.constant 0 : index
    %68 = vector.load %arg6[%c0_28, %c0_29] : memref<8x128xf32, #tpu.memory_space<vmem>>, vector<8x128xf32>
    tpu.vector_store %arg6[%c0_28, %c0_29], %67 {strides = array<i32>} : memref<8x128xf32, #tpu.memory_space<vmem>>, vector<8x128xf32>,
    return
  }
  func.func @transform_0(%arg0: i32) -> (i32, i32) {
    %c0_i32 = arith.constant 0 : i32
    %c0_i32_0 = arith.constant 0 : i32
    return %arg0, %c0_i32 : i32, i32
  }
  func.func @transform_1(%arg0: i32) -> (i32, i32, i32) {
    %c0_i32 = arith.constant 0 : i32
    %c0_i32_0 = arith.constant 0 : i32
    %c0_i32_1 = arith.constant 0 : i32
    %c0_i32_2 = arith.constant 0 : i32
    return %c0_i32, %c0_i32_0, %c0_i32_1 : i32, i32, i32
  }
  func.func @transform_2(%arg0: i32) -> (i32, i32, i32) {
    %c0_i32 = arith.constant 0 : i32
    %c0_i32_0 = arith.constant 0 : i32
    %c0_i32_1 = arith.constant 0 : i32
    %c0_i32_2 = arith.constant 0 : i32
    return %c0_i32, %c0_i32_0, %c0_i32_1 : i32, i32, i32
  }
  func.func @transform_3(%arg0: i32) -> (i32, i32) {
    %c0_i32 = arith.constant 0 : i32
    %c0_i32_0 = arith.constant 0 : i32
    %c0_i32_1 = arith.constant 0 : i32
    return %c0_i32, %c0_i32_0 : i32, i32
  }
  func.func @transform_4(%arg0: i32) -> (i32, i32) {
    %c0_i32 = arith.constant 0 : i32
    %c0_i32_0 = arith.constant 0 : i32
    %c0_i32_1 = arith.constant 0 : i32
    return %c0_i32, %c0_i32_0 : i32, i32
  }
  func.func @transform_5(%arg0: i32) -> (i32, i32) {
    %c0_i32 = arith.constant 0 : i32
    %c0_i32_0 = arith.constant 0 : i32
    return %arg0, %c0_i32 : i32, i32
  }
}

</mosaic_0001>

<llo_original>
// kernel: highway_forward.1
$region0: #{highway_forward.1}
  #allocation0 [shape = 'u32[]', space=smem, size = 0x4, offset = 0x4, fixed_abs, tag = 'smem constant byte address 0x4 - core index']
  #allocation1 [shape = 'u32[144,128]{1,0:T(1,128)}', space=vmem, size = 0x12000, scoped, tag = 'internal scratch']
  %s0 = inlined_call_operand.hbm [shape: f32[8,128], index: 0, kind: input, shape index: {}]
  %s1 = inlined_call_operand.hbm [shape: bf16[2,128,384], index: 1, kind: input, shape index: {}]
  %s2 = inlined_call_operand.vmem [shape: f32[2,1,384], index: 2, kind: input, shape index: {}]
  %s3 = inlined_call_operand.hbm [shape: bf16[128,128], index: 3, kind: input, shape index: {}]
  %s4 = inlined_call_operand.vmem [shape: f32[1,128], index: 4, kind: input, shape index: {}]
  %s5 = inlined_call_operand.hbm [shape: f32[8,128], index: 5, kind: output, shape index: {}]
  %s6 = sld [smem:[#allocation0]]
  $region42: #{highway_forward.1} parent=0
    _
  %s8 = ssub.s32 1, %s6
  %s9 = scalar_select 0, %s8, %s6
  $region1: #{highway_forward.1} parent=0
    #allocation2 [shape = 'u8[4096]{0}', space=vmem, size = 0x1000, scoped, tag = 'input window, operand 0, single buffered']
    #allocation3 [shape = 's32[1]{0}', space=sflag, size = 0x4, scoped, tag = 'scoped memory for highway_forward.1']
    #allocation4 [shape = 's32[1]{0}', space=sflag, size = 0x4, scoped, tag = 'scoped memory for highway_forward.1']
    #allocation5 [shape = 'u8[196608]{0}', space=vmem, size = 0x30000, scoped, tag = 'input window, operand 1, single buffered']
    #allocation6 [shape = 's32[1]{0}', space=sflag, size = 0x4, scoped, tag = 'scoped memory for highway_forward.1']
    #allocation7 [shape = 'u8[32768]{0}', space=vmem, size = 0x8000, scoped, tag = 'input window, operand 3, single buffered']
    #allocation8 [shape = 'u8[4096]{0}', space=vmem, size = 0x1000, scoped, tag = 'output window, operand 0, single buffered']
    %10 = vsyncpa [#allocation3], 0
    %11 = vsyncpa [#allocation6], 0
    %12 = vsyncpa [#allocation4], 0
    // Predicated region
    $region2: #{highway_forward.1} parent=1 // pred_check
      _
    $region3: #{highway_forward.1} parent=1 // pred_check_branch
      %14 = sbr.rel (0) target = $region5
    $region4: #{highway_forward.1} parent=1 // pred_region
      %s16 = ssub.s32 128, 128
      %17 = vsyncadd [#allocation3], %s16
      %s19 = sshll.u32 [#allocation2], 4
      %s20 = int_to_ptr.vmem [resolvable:$true] %s19
      %22 = dma.hbm_to_vmem [thread:$0]  %s0, 128, %s20, [#allocation3]
    $region5: #{highway_forward.1} parent=1 // pred_fallthru
      _
    // Predicated region
    $region6: #{highway_forward.1} parent=1 // pred_check
      _
    $region7: #{highway_forward.1} parent=1 // pred_check_branch
      %24 = sbr.rel (0) target = $region9
    $region8: #{highway_forward.1} parent=1 // pred_region
      %s26 = ssub.s32 6144, 6144
      %27 = vsyncadd [#allocation6], %s26
      %s28 = sshll.u32 [#allocation5], 4
      %s29 = int_to_ptr.vmem [resolvable:$true] %s28
      %34 = dma.hbm_to_vmem [thread:$0]  %s1, 6144, %s29, [#allocation6], 192, 192, 12
    $region9: #{highway_forward.1} parent=1 // pred_fallthru
      _
    // Predicated region
    $region10: #{highway_forward.1} parent=1 // pred_check
      _
    $region11: #{highway_forward.1} parent=1 // pred_check_branch
      %36 = sbr.rel (0) target = $region13
    $region12: #{highway_forward.1} parent=1 // pred_region
      _
    $region13: #{highway_forward.1} parent=1 // pred_fallthru
      _
    // Predicated region
    $region14: #{highway_forward.1} parent=1 // pred_check
      _
    $region15: #{highway_forward.1} parent=1 // pred_check_branch
      %38 = sbr.rel (0) target = $region17
    $region16: #{highway_forward.1} parent=1 // pred_region
      %s40 = ssub.s32 1024, 1024
      %41 = vsyncadd [#allocation6], %s40
      %s42 = sshll.u32 [#allocation7], 4
      %s43 = int_to_ptr.vmem [resolvable:$true] %s42
      %48 = dma.hbm_to_vmem [thread:$0]  %s3, 1024, %s43, [#allocation6], 64, 64, 4
    $region17: #{highway_forward.1} parent=1 // pred_fallthru
      _
    // Predicated region
    $region18: #{highway_forward.1} parent=1 // pred_check
      _
    $region19: #{highway_forward.1} parent=1 // pred_check_branch
      %50 = sbr.rel (0) target = $region21
    $region20: #{highway_forward.1} parent=1 // pred_region
      _
    $region21: #{highway_forward.1} parent=1 // pred_fallthru
      _
    // Predicated region
    $region22: #{highway_forward.1} parent=1 // pred_check
      _
    $region23: #{highway_forward.1} parent=1 // pred_check_branch
      %52 = sbr.rel (0) target = $region25
    $region24: #{highway_forward.1} parent=1 // pred_region
      %53 = dma.done [#allocation3], 128
    $region25: #{highway_forward.1} parent=1 // pred_fallthru
      _
    // Predicated region
    $region26: #{highway_forward.1} parent=1 // pred_check
      _
    $region27: #{highway_forward.1} parent=1 // pred_check_branch
      %55 = sbr.rel (0) target = $region29
    $region28: #{highway_forward.1} parent=1 // pred_region
      %56 = dma.done [#allocation6], 6144
    $region29: #{highway_forward.1} parent=1 // pred_fallthru
      _
    // Predicated region
    $region30: #{highway_forward.1} parent=1 // pred_check
      _
    $region31: #{highway_forward.1} parent=1 // pred_check_branch
      %58 = sbr.rel (0) target = $region33
    $region32: #{highway_forward.1} parent=1 // pred_region
      %59 = dma.done [#allocation6], 1024
    $region33: #{highway_forward.1} parent=1 // pred_fallthru
      _
    %v61 = vld [vmem:[#allocation2] sm:$0xff]
    %v62 = vpack.c.bf16 %v61, %v61
    %v63 = vld [vmem:[#allocation5] sm:$0xff]
    %v64 = vld [vmem:[#allocation5 + $0x8] sm:$0xf]
    %v65 = vld [vmem:[#allocation5 + $0xc] sm:$0xff]
    %v66 = vld [vmem:[#allocation5 + $0x14] sm:$0xf]
    %v67 = vld [vmem:[#allocation5 + $0x18] sm:$0xff]
    %v68 = vld [vmem:[#allocation5 + $0x20] sm:$0xf]
    %v69 = vld [vmem:[#allocation5 + $0x24] sm:$0xff]
    %v70 = vld [vmem:[#allocation5 + $0x2c] sm:$0xf]
    %v71 = vld [vmem:[#allocation5 + $0x30] sm:$0xff]
    %v72 = vld [vmem:[#allocation5 + $0x38] sm:$0xf]
    %v73 = vld [vmem:[#allocation5 + $0x3c] sm:$0xff]
    %v74 = vld [vmem:[#allocation5 + $0x44] sm:$0xf]
    %v75 = vld [vmem:[#allocation5 + $0x48] sm:$0xff]
    %v76 = vld [vmem:[#allocation5 + $0x50] sm:$0xf]
    %v77 = vld [vmem:[#allocation5 + $0x54] sm:$0xff]
    %v78 = vld [vmem:[#allocation5 + $0x5c] sm:$0xf]
    %v79 = vld [vmem:[#allocation5 + $0x60] sm:$0xff]
    %v80 = vld [vmem:[#allocation5 + $0x68] sm:$0xf]
    %v81 = vld [vmem:[#allocation5 + $0x6c] sm:$0xff]
    %v82 = vld [vmem:[#allocation5 + $0x74] sm:$0xf]
    %v83 = vld [vmem:[#allocation5 + $0x78] sm:$0xff]
    %v84 = vld [vmem:[#allocation5 + $0x80] sm:$0xf]
    %v85 = vld [vmem:[#allocation5 + $0x84] sm:$0xff]
    %v86 = vld [vmem:[#allocation5 + $0x8c] sm:$0xf]
    %v87 = vld [vmem:[#allocation5 + $0x90] sm:$0xff]
    %v88 = vld [vmem:[#allocation5 + $0x98] sm:$0xf]
    %v89 = vld [vmem:[#allocation5 + $0x9c] sm:$0xff]
    %v90 = vld [vmem:[#allocation5 + $0xa4] sm:$0xf]
    %v91 = vld [vmem:[#allocation5 + $0xa8] sm:$0xff]
    %v92 = vld [vmem:[#allocation5 + $0xb0] sm:$0xf]
    %v93 = vld [vmem:[#allocation5 + $0xb4] sm:$0xff]
    %v94 = vld [vmem:[#allocation5 + $0xbc] sm:$0xf]
    %v95 = vld [vmem:[%s2] sm:$0x7]
    %v97 = vlaneseq
    %v98 = vshrl.u32 %v97, 7
    %v99 = vsub.s32 0, %v98
    %v100 = vrot.slane %v95, %v99
    %v101 = vlaneseq
    %v102 = vshrl.u32 %v101, 7
    %v103 = vsub.s32 1, %v102
    %v104 = vrot.slane %v95, %v103
    %v105 = vlaneseq
    %v106 = vshrl.u32 %v105, 7
    %v107 = vsub.s32 2, %v106
    %v108 = vrot.slane %v95, %v107
    %v144 = vunpack.c.l.b16 %v63
    %v145 = vunpack.c.h.b16 %v63
    %v146 = vunpack.c.l.b16 %v64
    %v147 = vunpack.c.l.b16 %v65
    %v148 = vunpack.c.h.b16 %v65
    %v149 = vunpack.c.l.b16 %v66
    %v150 = vunpack.c.l.b16 %v67
    %v151 = vunpack.c.h.b16 %v67
    %v152 = vunpack.c.l.b16 %v68
    %v153 = vunpack.c.l.b16 %v69
    %v154 = vunpack.c.h.b16 %v69
    %v155 = vunpack.c.l.b16 %v70
    %v156 = vunpack.c.l.b16 %v71
    %v157 = vunpack.c.h.b16 %v71
    %v158 = vunpack.c.l.b16 %v72
    %v159 = vunpack.c.l.b16 %v73
    %v160 = vunpack.c.h.b16 %v73
    %v161 = vunpack.c.l.b16 %v74
    %v162 = vunpack.c.l.b16 %v75
    %v163 = vunpack.c.h.b16 %v75
    %v164 = vunpack.c.l.b16 %v76
    %v165 = vunpack.c.l.b16 %v77
    %v166 = vunpack.c.h.b16 %v77
    %v167 = vunpack.c.l.b16 %v78
    %v168 = vunpack.c.l.b16 %v79
    %v169 = vunpack.c.h.b16 %v79
    %v170 = vunpack.c.l.b16 %v80
    %v171 = vunpack.c.l.b16 %v81
    %v172 = vunpack.c.h.b16 %v81
    %v173 = vunpack.c.l.b16 %v82
    %v174 = vunpack.c.l.b16 %v83
    %v175 = vunpack.c.h.b16 %v83
    %v176 = vunpack.c.l.b16 %v84
    %v177 = vunpack.c.l.b16 %v85
    %v178 = vunpack.c.h.b16 %v85
    %v179 = vunpack.c.l.b16 %v86
    %v180 = vunpack.c.l.b16 %v87
    %v181 = vunpack.c.h.b16 %v87
    %v182 = vunpack.c.l.b16 %v88
    %v183 = vunpack.c.l.b16 %v89
    %v184 = vunpack.c.h.b16 %v89
    %v185 = vunpack.c.l.b16 %v90
    %v186 = vunpack.c.l.b16 %v91
    %v187 = vunpack.c.h.b16 %v91
    %v188 = vunpack.c.l.b16 %v92
    %v189 = vunpack.c.l.b16 %v93
    %v190 = vunpack.c.h.b16 %v93
    %v191 = vunpack.c.l.b16 %v94
    %v192 = vpack.c.b16 %v147, %v144
    %v193 = vpack.c.b16 %v148, %v145
    %v194 = vpack.c.b16 %v149, %v146
    %v195 = vpack.c.b16 %v153, %v150
    %v196 = vpack.c.b16 %v154, %v151
    %v197 = vpack.c.b16 %v155, %v152
    %v198 = vpack.c.b16 %v159, %v156
    %v199 = vpack.c.b16 %v160, %v157
    %v200 = vpack.c.b16 %v161, %v158
    %v201 = vpack.c.b16 %v165, %v162
    %v202 = vpack.c.b16 %v166, %v163
    %v203 = vpack.c.b16 %v167, %v164
    %v204 = vpack.c.b16 %v171, %v168
    %v205 = vpack.c.b16 %v172, %v169
    %v206 = vpack.c.b16 %v173, %v170
    %v207 = vpack.c.b16 %v177, %v174
    %v208 = vpack.c.b16 %v178, %v175
    %v209 = vpack.c.b16 %v179, %v176
    %v210 = vpack.c.b16 %v183, %v180
    %v211 = vpack.c.b16 %v184, %v181
    %v212 = vpack.c.b16 %v185, %v182
    %v213 = vpack.c.b16 %v189, %v186
    %v214 = vpack.c.b16 %v190, %v187
    %v215 = vpack.c.b16 %v191, %v188
    %240 = vmatprep.subr.bf16.mxu0 %v193
    %241 = vmatpush1.bf16.msra.mxu0 %v192
    %242 = vmatprep.subr.bf16.mxu0 %v196
    %243 = vmatpush1.bf16.msra.mxu0 %v195
    %244 = vmatprep.subr.bf16.mxu0 %v199
    %245 = vmatpush1.bf16.msra.mxu0 %v198
    %246 = vmatprep.subr.bf16.mxu0 %v202
    %247 = vmatpush1.bf16.msra.mxu0 %v201
    %248 = vmatprep.subr.bf16.mxu0 %v205
    %249 = vmatpush1.bf16.msra.mxu0 %v204
    %250 = vmatprep.subr.bf16.mxu0 %v208
    %251 = vmatpush1.bf16.msra.mxu0 %v207
    %252 = vmatprep.subr.bf16.mxu0 %v211
    %253 = vmatpush1.bf16.msra.mxu0 %v210
    %254 = vmatprep.subr.bf16.mxu0 %v214
    %255 = vmatpush1.bf16.msra.mxu0 %v213
    %256 = vmatprep.subr.bf16.mxu0 0
    %257 = vmatpush1.bf16.msra.mxu0 0
    %258 = vmatprep.subr.bf16.mxu0 0
    %259 = vmatpush1.bf16.msra.mxu0 0
    %260 = vmatprep.subr.bf16.mxu0 0
    %261 = vmatpush1.bf16.msra.mxu0 0
    %262 = vmatprep.subr.bf16.mxu0 0
    %263 = vmatpush1.bf16.msra.mxu0 0
    %264 = vmatprep.subr.bf16.mxu0 0
    %265 = vmatpush1.bf16.msra.mxu0 0
    %266 = vmatprep.subr.bf16.mxu0 0
    %267 = vmatpush1.bf16.msra.mxu0 0
    %268 = vmatprep.subr.bf16.mxu0 0
    %269 = vmatpush1.bf16.msra.mxu0 0
    %270 = vmatprep.subr.bf16.mxu0 0
    %271 = vmatpush1.bf16.msra.mxu0 0
    %272 = vmatprep.mubr.bf16.mxu0 0
    %273 = vmatmul.mubr.bf16.gmra.mrb[0].mxu0 %v62
    %v274 = vpop.f32.mrb[0].mxu0
    %v275 = vadd.f32 %v100, %v274
    %v276 = vpop.f32.mrb[0].mxu0
    %v277 = vadd.f32 %v104, %v276
    %v278 = vpop.f32.mrb[0].mxu0
    %v279 = vpop.f32.mrb[0].mxu0
    %280 = vdwg.mxu0
    %281 = vmatprep.subr.bf16.mxu0 0
    %282 = vmatpush1.bf16.msra.mxu0 %v194
    %283 = vmatprep.subr.bf16.mxu0 0
    %284 = vmatpush1.bf16.msra.mxu0 %v197
    %285 = vmatprep.subr.bf16.mxu0 0
    %286 = vmatpush1.bf16.msra.mxu0 %v200
    %287 = vmatprep.subr.bf16.mxu0 0
    %288 = vmatpush1.bf16.msra.mxu0 %v203
    %289 = vmatprep.subr.bf16.mxu0 0
    %290 = vmatpush1.bf16.msra.mxu0 %v206
    %291 = vmatprep.subr.bf16.mxu0 0
    %292 = vmatpush1.bf16.msra.mxu0 %v209
    %293 = vmatprep.subr.bf16.mxu0 0
    %294 = vmatpush1.bf16.msra.mxu0 %v212
    %295 = vmatprep.subr.bf16.mxu0 0
    %296 = vmatpush1.bf16.msra.mxu0 %v215
    %297 = vmatprep.subr.bf16.mxu0 0
    %298 = vmatpush1.bf16.msra.mxu0 0
    %299 = vmatprep.subr.bf16.mxu0 0
    %300 = vmatpush1.bf16.msra.mxu0 0
    %301 = vmatprep.subr.bf16.mxu0 0
    %302 = vmatpush1.bf16.msra.mxu0 0
    %303 = vmatprep.subr.bf16.mxu0 0
    %304 = vmatpush1.bf16.msra.mxu0 0
    %305 = vmatprep.subr.bf16.mxu0 0
    %306 = vmatpush1.bf16.msra.mxu0 0
    %307 = vmatprep.subr.bf16.mxu0 0
    %308 = vmatpush1.bf16.msra.mxu0 0
    %309 = vmatprep.subr.bf16.mxu0 0
    %310 = vmatpush1.bf16.msra.mxu0 0
    %311 = vmatprep.subr.bf16.mxu0 0
    %312 = vmatpush1.bf16.msra.mxu0 0
    %313 = vmatprep.mubr.bf16.mxu0 0
    %314 = vmatmul.mubr.bf16.gmra.mrb[0].mxu0 %v62
    %v315 = vpop.f32.mrb[0].mxu0
    %v316 = vadd.f32 %v108, %v315
    %v317 = vpop.f32.mrb[0].mxu0
    %v318 = vpop.f32.mrb[0].mxu0
    %v319 = vpop.f32.mrb[0].mxu0
    %320 = vdwg.mxu0
    %v321 = vsub.f32 0.0, %v275
    %v322 = vmul.f32 %v321, 1.442695
    %v323 = vpow.pop %v322
    %v324 = vadd.f32 %v323, 1.0
    %v325 = vrcp.pop %v324
    %v326 = vmax.f32 %v277, 0.0
    %v327 = vsub.f32 %v326, %v316
    %v328 = vmul.f32 %v325, %v327
    %v329 = vadd.f32 %v316, %v328
    %v330 = vpack.c.bf16 %v329, %v329
    %s331 = scalar_lea.vmem [#allocation5], 192
    %v332 = vld [vmem:[%s331] sm:$0xff]
    %v333 = vld [vmem:[%s331 + $0x8] sm:$0xf]
    %v334 = vld [vmem:[%s331 + $0xc] sm:$0xff]
    %v335 = vld [vmem:[%s331 + $0x14] sm:$0xf]
    %v336 = vld [vmem:[%s331 + $0x18] sm:$0xff]
    %v337 = vld [vmem:[%s331 + $0x20] sm:$0xf]
    %v338 = vld [vmem:[%s331 + $0x24] sm:$0xff]
    %v339 = vld [vmem:[%s331 + $0x2c] sm:$0xf]
    %v340 = vld [vmem:[%s331 + $0x30] sm:$0xff]
    %v341 = vld [vmem:[%s331 + $0x38] sm:$0xf]
    %v342 = vld [vmem:[%s331 + $0x3c] sm:$0xff]
    %v343 = vld [vmem:[%s331 + $0x44] sm:$0xf]
    %v344 = vld [vmem:[%s331 + $0x48] sm:$0xff]
    %v345 = vld [vmem:[%s331 + $0x50] sm:$0xf]
    %v346 = vld [vmem:[%s331 + $0x54] sm:$0xff]
    %v347 = vld [vmem:[%s331 + $0x5c] sm:$0xf]
    %v348 = vld [vmem:[%s331 + $0x60] sm:$0xff]
    %v349 = vld [vmem:[%s331 + $0x68] sm:$0xf]
    %v350 = vld [vmem:[%s331 + $0x6c] sm:$0xff]
    %v351 = vld [vmem:[%s331 + $0x74] sm:$0xf]
    %v352 = vld [vmem:[%s331 + $0x78] sm:$0xff]
    %v353 = vld [vmem:[%s331 + $0x80] sm:$0xf]
    %v354 = vld [vmem:[%s331 + $0x84] sm:$0xff]
    %v355 = vld [vmem:[%s331 + $0x8c] sm:$0xf]
    %v356 = vld [vmem:[%s331 + $0x90] sm:$0xff]
    %v357 = vld [vmem:[%s331 + $0x98] sm:$0xf]
    %v358 = vld [vmem:[%s331 + $0x9c] sm:$0xff]
    %v359 = vld [vmem:[%s331 + $0xa4] sm:$0xf]
    %v360 = vld [vmem:[%s331 + $0xa8] sm:$0xff]
    %v361 = vld [vmem:[%s331 + $0xb0] sm:$0xf]
    %v362 = vld [vmem:[%s331 + $0xb4] sm:$0xff]
    %v363 = vld [vmem:[%s331 + $0xbc] sm:$0xf]
    %s364 = scalar_lea.vmem %s2, 3
    %v365 = vld [vmem:[%s364] sm:$0x7]
    %v367 = vlaneseq
    %v368 = vshrl.u32 %v367, 7
    %v369 = vsub.s32 0, %v368
    %v370 = vrot.slane %v365, %v369
    %v371 = vlaneseq
    %v372 = vshrl.u32 %v371, 7
    %v373 = vsub.s32 1, %v372
    %v374 = vrot.slane %v365, %v373
    %v375 = vlaneseq
    %v376 = vshrl.u32 %v375, 7
    %v377 = vsub.s32 2, %v376
    %v378 = vrot.slane %v365, %v377
    %v414 = vunpack.c.l.b16 %v332
    %v415 = vunpack.c.h.b16 %v332
    %v416 = vunpack.c.l.b16 %v333
    %v417 = vunpack.c.l.b16 %v334
    %v418 = vunpack.c.h.b16 %v334
    %v419 = vunpack.c.l.b16 %v335
    %v420 = vunpack.c.l.b16 %v336
    %v421 = vunpack.c.h.b16 %v336
    %v422 = vunpack.c.l.b16 %v337
    %v423 = vunpack.c.l.b16 %v338
    %v424 = vunpack.c.h.b16 %v338
    %v425 = vunpack.c.l.b16 %v339
    %v426 = vunpack.c.l.b16 %v340
    %v427 = vunpack.c.h.b16 %v340
    %v428 = vunpack.c.l.b16 %v341
    %v429 = vunpack.c.l.b16 %v342
    %v430 = vunpack.c.h.b16 %v342
    %v431 = vunpack.c.l.b16 %v343
    %v432 = vunpack.c.l.b16 %v344
    %v433 = vunpack.c.h.b16 %v344
    %v434 = vunpack.c.l.b16 %v345
    %v435 = vunpack.c.l.b16 %v346
    %v436 = vunpack.c.h.b16 %v346
    %v437 = vunpack.c.l.b16 %v347
    %v438 = vunpack.c.l.b16 %v348
    %v439 = vunpack.c.h.b16 %v348
    %v440 = vunpack.c.l.b16 %v349
    %v441 = vunpack.c.l.b16 %v350
    %v442 = vunpack.c.h.b16 %v350
    %v443 = vunpack.c.l.b16 %v351
    %v444 = vunpack.c.l.b16 %v352
    %v445 = vunpack.c.h.b16 %v352
    %v446 = vunpack.c.l.b16 %v353
    %v447 = vunpack.c.l.b16 %v354
    %v448 = vunpack.c.h.b16 %v354
    %v449 = vunpack.c.l.b16 %v355
    %v450 = vunpack.c.l.b16 %v356
    %v451 = vunpack.c.h.b16 %v356
    %v452 = vunpack.c.l.b16 %v357
    %v453 = vunpack.c.l.b16 %v358
    %v454 = vunpack.c.h.b16 %v358
    %v455 = vunpack.c.l.b16 %v359
    %v456 = vunpack.c.l.b16 %v360
    %v457 = vunpack.c.h.b16 %v360
    %v458 = vunpack.c.l.b16 %v361
    %v459 = vunpack.c.l.b16 %v362
    %v460 = vunpack.c.h.b16 %v362
    %v461 = vunpack.c.l.b16 %v363
    %v462 = vpack.c.b16 %v417, %v414
    %v463 = vpack.c.b16 %v418, %v415
    %v464 = vpack.c.b16 %v419, %v416
    %v465 = vpack.c.b16 %v423, %v420
    %v466 = vpack.c.b16 %v424, %v421
    %v467 = vpack.c.b16 %v425, %v422
    %v468 = vpack.c.b16 %v429, %v426
    %v469 = vpack.c.b16 %v430, %v427
    %v470 = vpack.c.b16 %v431, %v428
    %v471 = vpack.c.b16 %v435, %v432
    %v472 = vpack.c.b16 %v436, %v433
    %v473 = vpack.c.b16 %v437, %v434
    %v474 = vpack.c.b16 %v441, %v438
    %v475 = vpack.c.b16 %v442, %v439
    %v476 = vpack.c.b16 %v443, %v440
    %v477 = vpack.c.b16 %v447, %v444
    %v478 = vpack.c.b16 %v448, %v445
    %v479 = vpack.c.b16 %v449, %v446
    %v480 = vpack.c.b16 %v453, %v450
    %v481 = vpack.c.b16 %v454, %v451
    %v482 = vpack.c.b16 %v455, %v452
    %v483 = vpack.c.b16 %v459, %v456
    %v484 = vpack.c.b16 %v460, %v457
    %v485 = vpack.c.b16 %v461, %v458
    %510 = vmatprep.subr.bf16.mxu0 %v463
    %511 = vmatpush1.bf16.msra.mxu0 %v462
    %512 = vmatprep.subr.bf16.mxu0 %v466
    %513 = vmatpush1.bf16.msra.mxu0 %v465
    %514 = vmatprep.subr.bf16.mxu0 %v469
    %515 = vmatpush1.bf16.msra.mxu0 %v468
    %516 = vmatprep.subr.bf16.mxu0 %v472
    %517 = vmatpush1.bf16.msra.mxu0 %v471
    %518 = vmatprep.subr.bf16.mxu0 %v475
    %519 = vmatpush1.bf16.msra.mxu0 %v474
    %520 = vmatprep.subr.bf16.mxu0 %v478
    %521 = vmatpush1.bf16.msra.mxu0 %v477
    %522 = vmatprep.subr.bf16.mxu0 %v481
    %523 = vmatpush1.bf16.msra.mxu0 %v480
    %524 = vmatprep.subr.bf16.mxu0 %v484
    %525 = vmatpush1.bf16.msra.mxu0 %v483
    %526 = vmatprep.subr.bf16.mxu0 0
    %527 = vmatpush1.bf16.msra.mxu0 0
    %528 = vmatprep.subr.bf16.mxu0 0
    %529 = vmatpush1.bf16.msra.mxu0 0
    %530 = vmatprep.subr.bf16.mxu0 0
    %531 = vmatpush1.bf16.msra.mxu0 0
    %532 = vmatprep.subr.bf16.mxu0 0
    %533 = vmatpush1.bf16.msra.mxu0 0
    %534 = vmatprep.subr.bf16.mxu0 0
    %535 = vmatpush1.bf16.msra.mxu0 0
    %536 = vmatprep.subr.bf16.mxu0 0
    %537 = vmatpush1.bf16.msra.mxu0 0
    %538 = vmatprep.subr.bf16.mxu0 0
    %539 = vmatpush1.bf16.msra.mxu0 0
    %540 = vmatprep.subr.bf16.mxu0 0
    %541 = vmatpush1.bf16.msra.mxu0 0
    %542 = vmatprep.mubr.bf16.mxu0 0
    %543 = vmatmul.mubr.bf16.gmra.mrb[0].mxu0 %v330
    %v544 = vpop.f32.mrb[0].mxu0
    %v545 = vadd.f32 %v370, %v544
    %v546 = vpop.f32.mrb[0].mxu0
    %v547 = vadd.f32 %v374, %v546
    %v548 = vpop.f32.mrb[0].mxu0
    %v549 = vpop.f32.mrb[0].mxu0
    %550 = vdwg.mxu0
    %551 = vmatprep.subr.bf16.mxu0 0
    %552 = vmatpush1.bf16.msra.mxu0 %v464
    %553 = vmatprep.subr.bf16.mxu0 0
    %554 = vmatpush1.bf16.msra.mxu0 %v467
    %555 = vmatprep.subr.bf16.mxu0 0
    %556 = vmatpush1.bf16.msra.mxu0 %v470
    %557 = vmatprep.subr.bf16.mxu0 0
    %558 = vmatpush1.bf16.msra.mxu0 %v473
    %559 = vmatprep.subr.bf16.mxu0 0
    %560 = vmatpush1.bf16.msra.mxu0 %v476
    %561 = vmatprep.subr.bf16.mxu0 0
    %562 = vmatpush1.bf16.msra.mxu0 %v479
    %563 = vmatprep.subr.bf16.mxu0 0
    %564 = vmatpush1.bf16.msra.mxu0 %v482
    %565 = vmatprep.subr.bf16.mxu0 0
    %566 = vmatpush1.bf16.msra.mxu0 %v485
    %567 = vmatprep.subr.bf16.mxu0 0
    %568 = vmatpush1.bf16.msra.mxu0 0
    %569 = vmatprep.subr.bf16.mxu0 0
    %570 = vmatpush1.bf16.msra.mxu0 0
    %571 = vmatprep.subr.bf16.mxu0 0
    %572 = vmatpush1.bf16.msra.mxu0 0
    %573 = vmatprep.subr.bf16.mxu0 0
    %574 = vmatpush1.bf16.msra.mxu0 0
    %575 = vmatprep.subr.bf16.mxu0 0
    %576 = vmatpush1.bf16.msra.mxu0 0
    %577 = vmatprep.subr.bf16.mxu0 0
    %578 = vmatpush1.bf16.msra.mxu0 0
    %579 = vmatprep.subr.bf16.mxu0 0
    %580 = vmatpush1.bf16.msra.mxu0 0
    %581 = vmatprep.subr.bf16.mxu0 0
    %582 = vmatpush1.bf16.msra.mxu0 0
    %583 = vmatprep.mubr.bf16.mxu0 0
    %584 = vmatmul.mubr.bf16.gmra.mrb[0].mxu0 %v330
    %v585 = vpop.f32.mrb[0].mxu0
    %v586 = vadd.f32 %v378, %v585
    %v587 = vpop.f32.mrb[0].mxu0
    %v588 = vpop.f32.mrb[0].mxu0
    %v589 = vpop.f32.mrb[0].mxu0
    %590 = vdwg.mxu0
    %v591 = vsub.f32 0.0, %v545
    %v592 = vmul.f32 %v591, 1.442695
    %v593 = vpow.pop %v592
    %v594 = vadd.f32 %v593, 1.0
    %v595 = vrcp.pop %v594
    %v596 = vmax.f32 %v547, 0.0
    %v597 = vsub.f32 %v596, %v586
    %v598 = vmul.f32 %v595, %v597
    %v599 = vadd.f32 %v586, %v598
    %v600 = vpack.c.bf16 %v599, %v599
    %v601 = vld [vmem:[#allocation7] sm:$0xf]
    %v602 = vld [vmem:[#allocation7 + $0x4] sm:$0xf]
    %v603 = vld [vmem:[#allocation7 + $0x8] sm:$0xf]
    %v604 = vld [vmem:[#allocation7 + $0xc] sm:$0xf]
    %v605 = vld [vmem:[#allocation7 + $0x10] sm:$0xf]
    %v606 = vld [vmem:[#allocation7 + $0x14] sm:$0xf]
    %v607 = vld [vmem:[#allocation7 + $0x18] sm:$0xf]
    %v608 = vld [vmem:[#allocation7 + $0x1c] sm:$0xf]
    %v609 = vld [vmem:[#allocation7 + $0x20] sm:$0xf]
    %v610 = vld [vmem:[#allocation7 + $0x24] sm:$0xf]
    %v611 = vld [vmem:[#allocation7 + $0x28] sm:$0xf]
    %v612 = vld [vmem:[#allocation7 + $0x2c] sm:$0xf]
    %v613 = vld [vmem:[#allocation7 + $0x30] sm:$0xf]
    %v614 = vld [vmem:[#allocation7 + $0x34] sm:$0xf]
    %v615 = vld [vmem:[#allocation7 + $0x38] sm:$0xf]
    %v616 = vld [vmem:[#allocation7 + $0x3c] sm:$0xf]
    %v617 = vld [vmem:[%s4] sm:$0x1]
    %v619 = vlaneseq
    %v620 = vshrl.u32 %v619, 7
    %v621 = vsub.s32 0, %v620
    %v622 = vrot.slane %v617, %v621
    %v640 = vunpack.c.l.b16 %v601
    %v641 = vunpack.c.l.b16 %v602
    %v642 = vunpack.c.l.b16 %v603
    %v643 = vunpack.c.l.b16 %v604
    %v644 = vunpack.c.l.b16 %v605
    %v645 = vunpack.c.l.b16 %v606
    %v646 = vunpack.c.l.b16 %v607
    %v647 = vunpack.c.l.b16 %v608
    %v648 = vunpack.c.l.b16 %v609
    %v649 = vunpack.c.l.b16 %v610
    %v650 = vunpack.c.l.b16 %v611
    %v651 = vunpack.c.l.b16 %v612
    %v652 = vunpack.c.l.b16 %v613
    %v653 = vunpack.c.l.b16 %v614
    %v654 = vunpack.c.l.b16 %v615
    %v655 = vunpack.c.l.b16 %v616
    %v656 = vpack.c.b16 %v641, %v640
    %v657 = vpack.c.b16 %v643, %v642
    %v658 = vpack.c.b16 %v645, %v644
    %v659 = vpack.c.b16 %v647, %v646
    %v660 = vpack.c.b16 %v649, %v648
    %v661 = vpack.c.b16 %v651, %v650
    %v662 = vpack.c.b16 %v653, %v652
    %v663 = vpack.c.b16 %v655, %v654
    %672 = vmatprep.subr.bf16.mxu0 0
    %673 = vmatpush1.bf16.msra.mxu0 %v656
    %674 = vmatprep.subr.bf16.mxu0 0
    %675 = vmatpush1.bf16.msra.mxu0 %v657
    %676 = vmatprep.subr.bf16.mxu0 0
    %677 = vmatpush1.bf16.msra.mxu0 %v658
    %678 = vmatprep.subr.bf16.mxu0 0
    %679 = vmatpush1.bf16.msra.mxu0 %v659
    %680 = vmatprep.subr.bf16.mxu0 0
    %681 = vmatpush1.bf16.msra.mxu0 %v660
    %682 = vmatprep.subr.bf16.mxu0 0
    %683 = vmatpush1.bf16.msra.mxu0 %v661
    %684 = vmatprep.subr.bf16.mxu0 0
    %685 = vmatpush1.bf16.msra.mxu0 %v662
    %686 = vmatprep.subr.bf16.mxu0 0
    %687 = vmatpush1.bf16.msra.mxu0 %v663
    %688 = vmatprep.subr.bf16.mxu0 0
    %689 = vmatpush1.bf16.msra.mxu0 0
    %690 = vmatprep.subr.bf16.mxu0 0
    %691 = vmatpush1.bf16.msra.mxu0 0
    %692 = vmatprep.subr.bf16.mxu0 0
    %693 = vmatpush1.bf16.msra.mxu0 0
    %694 = vmatprep.subr.bf16.mxu0 0
    %695 = vmatpush1.bf16.msra.mxu0 0
    %696 = vmatprep.subr.bf16.mxu0 0
    %697 = vmatpush1.bf16.msra.mxu0 0
    %698 = vmatprep.subr.bf16.mxu0 0
    %699 = vmatpush1.bf16.msra.mxu0 0
    %700 = vmatprep.subr.bf16.mxu0 0
    %701 = vmatpush1.bf16.msra.mxu0 0
    %702 = vmatprep.subr.bf16.mxu0 0
    %703 = vmatpush1.bf16.msra.mxu0 0
    %704 = vmatprep.mubr.bf16.mxu0 0
    %705 = vmatmul.mubr.bf16.gmra.mrb[0].mxu0 %v600
    %v706 = vpop.f32.mrb[0].mxu0
    %v707 = vadd.f32 %v622, %v706
    %v708 = vpop.f32.mrb[0].mxu0
    %v709 = vpop.f32.mrb[0].mxu0
    %v710 = vpop.f32.mrb[0].mxu0
    %711 = vdwg.mxu0
    %v712 = vlaneseq
    %v713 = vand.u32 %v712, 127
    %vm714 = vcmp.lt.s32.totalorder %v713, 41
    %v715 = vsel %vm714, %v707, -inf
    %716 = vmax.xlane.f32.xlu0 %v715
    %v717 = vpop.xlane.xlu0 %716
    %v718 = vsub.f32 %v715, %v717
    %v719 = vmul.f32 %v718, 1.442695
    %v720 = vpow.pop %v719
    %721 = vadd.xlane.f32.xlu0 %v720
    %v722 = vpop.xlane.xlu0 %721
    %v723 = vlog2.pop %v722
    %v724 = vmul.f32 %v723, 0.6931472
    %v725 = vsub.f32 %v718, %v724
    %v726 = vsel %vm714, %v725, 0.0
    %727 = vst [vmem:[#allocation8] sm:$0xff] %v726
    // Predicated region
    $region34: #{highway_forward.1} parent=1 // pred_check
      _
    $region35: #{highway_forward.1} parent=1 // pred_check_branch
      %729 = sbr.rel (0) target = $region37
    $region36: #{highway_forward.1} parent=1 // pred_region
      %s731 = ssub.s32 128, 128
      %732 = vsyncadd [#allocation4], %s731
      %s734 = sshll.u32 [#allocation8], 4
      %s735 = int_to_ptr.vmem [resolvable:$true] %s734
      %737 = dma.vmem_to_hbm [thread:$0]  %s735, 128, %s5, [#allocation4]
    $region37: #{highway_forward.1} parent=1 // pred_fallthru
      _
    // Predicated region
    $region38: #{highway_forward.1} parent=1 // pred_check
      _
    $region39: #{highway_forward.1} parent=1 // pred_check_branch
      %739 = sbr.rel (0) target = $region41
    $region40: #{highway_forward.1} parent=1 // pred_region
      %740 = dma.done [#allocation4], 128
    $region41: #{highway_forward.1} parent=1 // pred_fallthru
      _
    %741 = vsyncpa [#allocation3], 1
    %742 = vsyncpa [#allocation6], 1
    %743 = vsyncpa [#allocation4], 1

</llo_original>
